<compile_context>
chip_gen: v5e
topology: v5e:2x2
jax: 0.10.0
libtpu: 0.0.40
codegen_flags: <defaults>
</compile_context>

<pallas_src>
import functools

import numpy as np
import jax
import jax.numpy as jnp
from jax import lax
from jax.experimental import pallas as pl
from jax.experimental.pallas import tpu as pltpu


def _interp_weights(out_size: int, in_size: int) -> np.ndarray:
    """Dense (out_size, in_size) matrix reproducing PyTorch 1-D linear
    interpolation weights (align_corners=False, half-pixel centers)."""
    ratio = in_size / out_size
    i = np.arange(out_size, dtype=np.float64)
    src = ratio * (i + 0.5) - 0.5
    src = np.maximum(src, 0.0)
    i0 = np.minimum(np.floor(src).astype(np.int64), in_size - 1)
    i1 = np.where(i0 < in_size - 1, i0 + 1, i0)
    lam1 = src - i0
    lam0 = 1.0 - lam1
    a = np.zeros((out_size, in_size), dtype=np.float64)
    rows = np.arange(out_size)
    np.add.at(a, (rows, i0), lam0)
    np.add.at(a, (rows, i1), lam1)
    return a


@functools.lru_cache(maxsize=None)
def _fused_k(H, W, D, Hn, Wn, Dn):
    """Compile-time constant (cached on host AND on device): one fused matrix
    mapping the concatenated flattened plane windows [xy | xz | yz] to the
    flattened (H*W*D) output grid.  Broadcast along each plane's missing axis
    and the final 1/3 are folded in; contraction dim is zero-padded to a
    multiple of 128 lanes.  Returns (k_device, kc, kp)."""
    a_h = _interp_weights(H, Hn)   # (H, Hn)
    a_w = _interp_weights(W, Wn)   # (W, Wn)
    a_d = _interp_weights(D, Dn)   # (D, Dn)
    s = 1.0 / 3.0
    # K_xy[m*Wn+n, h*W*D + w*D + d] = a_h[h,m] * a_w[w,n] / 3   (all d)
    k_xy = np.einsum('hm,wn->mnhw', a_h, a_w)[..., None] * np.ones((D,))
    k_xy = (s * k_xy).reshape(Hn * Wn, H * W * D)
    # K_xz[m*Dn+n, h*W*D + w*D + d] = a_h[h,m] * a_d[d,n] / 3   (all w)
    k_xz = np.einsum('hm,dn->mnhd', a_h, a_d)[:, :, :, None, :] * np.ones((W, 1))
    k_xz = (s * k_xz).reshape(Hn * Dn, H * W * D)
    # K_yz[m*Dn+n, h*W*D + w*D + d] = a_w[w,m] * a_d[d,n] / 3   (all h)
    k_yz = np.einsum('wm,dn->mnwd', a_w, a_d)[:, :, None, :, :] * np.ones((H, 1, 1))
    k_yz = (s * k_yz).reshape(Wn * Dn, H * W * D)
    k = np.concatenate([k_xy, k_xz, k_yz], axis=0)        # (Kc, H*W*D)
    kc = k.shape[0]
    kp = -(-kc // 128) * 128                               # pad to 128-lane tile
    k_pad = np.zeros((kp, H * W * D), np.float32)
    k_pad[:kc, :] = k
    return jnp.asarray(k_pad), kc, kp                      # device array cached


def _triplane_kernel(p_ref, k_ref, o_ref):
    # One fused MXU matmul per block: (C, Kp) @ (Kp, H*W*D), lane-dense store.
    o_ref[...] = jnp.dot(p_ref[...], k_ref[...],
                         preferred_element_type=jnp.float32
                         ).astype(o_ref.dtype)


@functools.partial(jax.jit, static_argnames=("H", "W", "D", "Hn", "Wn", "Dn"))
def _triplane_blocks(xy, xz, yz, offs, k_pad, *, H, W, D, Hn, Wn, Dn):
    """Jitted compute: dynamic offsets, one compiled executable for all blocks.

    xy: (1,C,2R,2R,1), xz: (1,C,2R,1,2R), yz: (1,C,1,2R,2R)
    offs: (N, 3) int32 [bx, by, bz] per block
    k_pad: (Kp, H*W*D) cached constant
    returns (N, C, H, W, D) float32
    """
    C = xy.shape[1]
    N = offs.shape[0]
    Kp = k_pad.shape[0]
    HWD = H * W * D

    xy3 = xy[0, :, :, :, 0]                                # (C, 2R, 2R)
    xz3 = xz[0, :, :, 0, :]
    yz3 = yz[0, :, 0, :, :]

    # TODO(synk): PyTorch slicing silently clips windows that run past 2*base_r
    # (shrinking the interp input); lax.dynamic_slice instead clamps the start,
    # so out-of-range blocks diverge from PyTorch.  In-range blocks are exact.
    def extract(off):
        bx, by, bz = off[0], off[1], off[2]
        pxy = lax.dynamic_slice(xy3, (0, bx, by), (C, Hn, Wn)).reshape(C, Hn * Wn)
        pxz = lax.dynamic_slice(xz3, (0, bx, bz), (C, Hn, Dn)).reshape(C, Hn * Dn)
        pyz = lax.dynamic_slice(yz3, (0, by, bz), (C, Wn, Dn)).reshape(C, Wn * Dn)
        p = jnp.concatenate([pxy, pxz, pyz], axis=1)       # (C, Kc)
        return jnp.pad(p, ((0, 0), (0, Kp - p.shape[1])))  # zero-pad to (C, Kp)

    p_all = jax.vmap(extract)(offs)                        # (N, C, Kp)

    out2d = pl.pallas_call(
        _triplane_kernel,
        out_shape=jax.ShapeDtypeStruct((N, C, HWD), jnp.float32),
        grid=(N,),
        in_specs=[
            # per-block operand, block axis squeezed out of the kernel view
            pl.BlockSpec((None, C, Kp), lambda i: (i, 0, 0)),
            # constant K: same block every grid step -> stays VMEM-resident
            pl.BlockSpec((Kp, HWD), lambda i: (0, 0)),
        ],
        out_specs=pl.BlockSpec((None, C, HWD), lambda i: (i, 0, 0)),
        compiler_params=pltpu.CompilerParams(
            # block axis is independent -> shard across v7x's 2 TensorCores
            dimension_semantics=("parallel",),
            # footprint: resident K (~0.77 MiB) + double-buffered tiny
            # operand/output tiles (< 0.1 MiB) -- well under this limit.
            vmem_limit_bytes=32 * 1024 * 1024),
    )(p_all, k_pad)

    return out2d.reshape(N, C, H, W, D)


def triplane_forward(xy, xz, yz, shape, info, *, base_r, base_spacing):
    """Matches TriPlane.forward: uses info[0] only, returns (1, C, H, W, D)."""
    spacing, bx, by, bz = info[0]
    H, W, D = shape
    # int() truncation kept to match PyTorch exactly (spec uses int()).
    Hn = int(spacing / base_spacing * H)
    Wn = int(spacing / base_spacing * W)
    Dn = int(spacing / base_spacing * D)
    bx = int(bx * base_r + base_r)
    by = int(by * base_r + base_r)
    bz = int(bz * base_r + base_r)

    k_pad, _, _ = _fused_k(H, W, D, Hn, Wn, Dn)            # cached (host+device)
    offs = jnp.array([[bx, by, bz]], dtype=jnp.int32)      # dynamic -> no retrace

    out = _triplane_blocks(xy, xz, yz, offs, k_pad,
                           H=H, W=W, D=D, Hn=Hn, Wn=Wn, Dn=Dn)
    # (1, C, H, W, D): contiguous reshape/index, free in the wrapper.
    return out[0][None]


def _reference(xy, xz, yz, shape, info, *, base_r, base_spacing):
    """Plain-JAX reference with the factored (two-stage) interpolation math."""
    spacing, bx, by, bz = info[0]
    bx = int(bx * base_r + base_r)
    by = int(by * base_r + base_r)
    bz = int(bz * base_r + base_r)
    H, W, D = shape
    Hn = int(spacing / base_spacing * H)
    Wn = int(spacing / base_spacing * W)
    Dn = int(spacing / base_spacing * D)
    a_h = jnp.asarray(_interp_weights(H, Hn), jnp.float32)
    a_w = jnp.asarray(_interp_weights(W, Wn), jnp.float32)
    a_d = jnp.asarray(_interp_weights(D, Dn), jnp.float32)
    p_xy = xy[0, :, bx:bx + Hn, by:by + Wn, 0]
    p_xz = xz[0, :, bx:bx + Hn, 0, bz:bz + Dn]
    p_yz = yz[0, :, 0, by:by + Wn, bz:bz + Dn]
    xy_i = jnp.einsum('hm,cmn,wn->chw', a_h, p_xy, a_w)
    xz_i = jnp.einsum('hm,cmn,dn->chd', a_h, p_xz, a_d)
    yz_i = jnp.einsum('wm,cmn,dn->cwd', a_w, p_yz, a_d)
    return ((xy_i[:, :, :, None] + xz_i[:, :, None, :] + yz_i[:, None, :, :])
            / 3.0)[None]


if __name__ == "__main__":
    # Small, forward-consistent configuration.
    base_r, base_spacing, dim = 16, 0.8, 8

    key = jax.random.PRNGKey(0)
    k1, k2, k3 = jax.random.split(key, 3)
    # Parameter shapes from TriPlane.__init__ (torch.zeros -> deterministic
    # random init here so the test is non-trivial).
    xy = jax.random.normal(k1, (1, dim, 2 * base_r, 2 * base_r, 1), jnp.float32)
    xz = jax.random.normal(k2, (1, dim, 2 * base_r, 1, 2 * base_r), jnp.float32)
    yz = jax.random.normal(k3, (1, dim, 1, 2 * base_r, 2 * base_r), jnp.float32)

    shape = (8, 8, 8)                              # H, W, D
    # Two different block offsets: both reuse the SAME compiled executable
    # (offsets are dynamic) and the SAME cached device constant K.
    infos = [
        [(1.0, 0.1, -0.2, 0.25)],                  # (spacing, bx, by, bz)
        [(1.0, -0.3, 0.05, -0.1)],
    ]

    for info in infos:
        out = triplane_forward(xy, xz, yz, shape, info,
                               base_r=base_r, base_spacing=base_spacing)
        out = jax.block_until_ready(out)
        ref = _reference(xy, xz, yz, shape, info,
                         base_r=base_r, base_spacing=base_spacing)
        np.testing.assert_allclose(np.asarray(out), np.asarray(ref),
                                   rtol=1e-4, atol=1e-4)
        assert out.shape == (1, dim, 8, 8, 8)

    print("KERNEL_OK")
</pallas_src>

<mosaic_0001>
module attributes {stable_mosaic.version = 11 : i64} {
  func.func @_triplane_kernel(%arg0: i32, %arg1: memref<1x8x384xf32, #tpu.memory_space<vmem>>, %arg2: memref<384x512xf32, #tpu.memory_space<vmem>>, %arg3: memref<1x8x512xf32, #tpu.memory_space<vmem>>) attributes {dimension_semantics = [#tpu.dimension_semantics<parallel>], iteration_bounds = array<i64: 1>, scalar_prefetch = 0 : i64, scratch_operands = 0 : i64, tpu.core_type = #tpu.core_type<tc>, window_params = [{transform_indices = @transform_0, window_bounds = array<i64: 1, 8, 384>}, {pipeline_mode = #tpu.pipeline_mode<synchronous>, transform_indices = @transform_1, window_bounds = array<i64: 384, 512>}, {transform_indices = @transform_2, window_bounds = array<i64: 1, 8, 512>}]} {
    %c0 = arith.constant 0 : index
    %c0_0 = arith.constant 0 : index
    %c0_1 = arith.constant 0 : index
    %0 = vector.load %arg1[%c0, %c0_0, %c0_1] : memref<1x8x384xf32, #tpu.memory_space<vmem>>, vector<1x8x384xf32>
    %1 = vector.shape_cast %0 : vector<1x8x384xf32> to vector<8x384xf32>
    %c0_2 = arith.constant 0 : index
    %c0_3 = arith.constant 0 : index
    %2 = vector.load %arg2[%c0_2, %c0_3] : memref<384x512xf32, #tpu.memory_space<vmem>>, vector<384x512xf32>
    %cst = arith.constant dense<0.000000e+00> : vector<8x512xf32>
    %3 = tpu.matmul %1, %2, %cst {dimension_numbers = #tpu.dot_dimension_numbers<[1], [0], [0], [1], [0, 0, 1, 1], [], []>} : vector<8x384xf32>, vector<384x512xf32>, vector<8x512xf32> -> vector<8x512xf32>
    %c0_4 = arith.constant 0 : index
    %c0_5 = arith.constant 0 : index
    %c0_6 = arith.constant 0 : index
    %4 = vector.load %arg3[%c0_4, %c0_5, %c0_6] : memref<1x8x512xf32, #tpu.memory_space<vmem>>, vector<1x8x512xf32>
    %5 = vector.shape_cast %4 : vector<1x8x512xf32> to vector<8x512xf32>
    %6 = vector.shape_cast %3 : vector<8x512xf32> to vector<1x8x512xf32>
    tpu.vector_store %arg3[%c0_4, %c0_5, %c0_6], %6 {strides = array<i32>} : memref<1x8x512xf32, #tpu.memory_space<vmem>>, vector<1x8x512xf32>,
    return
  }
  func.func @transform_0(%arg0: i32) -> (i32, i32, i32) {
    %c0_i32 = arith.constant 0 : i32
    %c0_i32_0 = arith.constant 0 : i32
    %c0_i32_1 = arith.constant 0 : i32
    return %arg0, %c0_i32, %c0_i32_0 : i32, i32, i32
  }
  func.func @transform_1(%arg0: i32) -> (i32, i32) {
    %c0_i32 = arith.constant 0 : i32
    %c0_i32_0 = arith.constant 0 : i32
    %c0_i32_1 = arith.constant 0 : i32
    return %c0_i32, %c0_i32_0 : i32, i32
  }
  func.func @transform_2(%arg0: i32) -> (i32, i32, i32) {
    %c0_i32 = arith.constant 0 : i32
    %c0_i32_0 = arith.constant 0 : i32
    %c0_i32_1 = arith.constant 0 : i32
    return %arg0, %c0_i32, %c0_i32_0 : i32, i32, i32
  }
}

</mosaic_0001>

<llo_original>
// kernel: _triplane_blocks.1
$region0: #{_triplane_blocks.1}
  #allocation0 [shape = 'u32[]', space=smem, size = 0x4, offset = 0x4, fixed_abs, tag = 'smem constant byte address 0x4 - core index']
  #allocation1 [shape = 'u32[72,128]{1,0:T(1,128)}', space=vmem, size = 0x9000, scoped, tag = 'internal scratch']
  %s0 = inlined_call_operand.vmem [shape: f32[1,8,384], index: 0, kind: input, shape index: {}]
  %s1 = inlined_call_operand.hbm [shape: f32[384,512], index: 1, kind: input, shape index: {}]
  %s2 = inlined_call_operand.vmem [shape: f32[1,8,512], index: 2, kind: output, shape index: {}]
  %s3 = sld [smem:[#allocation0]]
  $region22: #{_triplane_blocks.1} parent=0
    _
  %s5 = ssub.s32 1, %s3
  %s6 = scalar_select 0, %s5, %s3
  $region1: #{_triplane_blocks.1} parent=0
    #allocation2 [shape = 'u8[786432]{0}', space=vmem, size = 0xc0000, scoped, tag = 'input window, operand 1, single buffered']
    #allocation3 [shape = 's32[1]{0}', space=sflag, size = 0x4, scoped, tag = 'scoped memory for _triplane_blocks.1']
    %7 = vsyncpa [#allocation3], 0
    // Predicated region
    $region2: #{_triplane_blocks.1} parent=1 // pred_check
      _
    $region3: #{_triplane_blocks.1} parent=1 // pred_check_branch
      %9 = sbr.rel (0) target = $region5
    $region4: #{_triplane_blocks.1} parent=1 // pred_region
      _
    $region5: #{_triplane_blocks.1} parent=1 // pred_fallthru
      _
    // Predicated region
    $region6: #{_triplane_blocks.1} parent=1 // pred_check
      _
    $region7: #{_triplane_blocks.1} parent=1 // pred_check_branch
      %11 = sbr.rel (0) target = $region9
    $region8: #{_triplane_blocks.1} parent=1 // pred_region
      %13 = vsyncadd [#allocation3], 0
      %s14 = sshll.u32 %s1, 4
      %s15 = int_to_ptr.hbm [resolvable:$true] %s14
      %s16 = sshll.u32 [#allocation2], 4
      %s17 = int_to_ptr.vmem [resolvable:$true] %s16
      %22 = dma.hbm_to_vmem [thread:$0]  %s15, 24576, %s17, [#allocation3], 512, 512, 32
    $region9: #{_triplane_blocks.1} parent=1 // pred_fallthru
      _
    // Predicated region
    $region10: #{_triplane_blocks.1} parent=1 // pred_check
      _
    $region11: #{_triplane_blocks.1} parent=1 // pred_check_branch
      %24 = sbr.rel (0) target = $region13
    $region12: #{_triplane_blocks.1} parent=1 // pred_region
      %26 = dma.done [#allocation3], 24576
    $region13: #{_triplane_blocks.1} parent=1 // pred_fallthru
      _
    %v27 = vld [vmem:[%s0] sm:$0xff]
    %v28 = vld [vmem:[%s0 + $0x8] sm:$0xff]
    %v29 = vld [vmem:[%s0 + $0x10] sm:$0xff]
    %v30 = vld [vmem:[#allocation2] sm:$0xff]
    %v31 = vld [vmem:[#allocation2 + $0x8] sm:$0xff]
    %v32 = vld [vmem:[#allocation2 + $0x10] sm:$0xff]
    %v33 = vld [vmem:[#allocation2 + $0x18] sm:$0xff]
    %v34 = vld [vmem:[#allocation2 + $0x20] sm:$0xff]
    %v35 = vld [vmem:[#allocation2 + $0x28] sm:$0xff]
    %v36 = vld [vmem:[#allocation2 + $0x30] sm:$0xff]
    %v37 = vld [vmem:[#allocation2 + $0x38] sm:$0xff]
    %v38 = vld [vmem:[#allocation2 + $0x40] sm:$0xff]
    %v39 = vld [vmem:[#allocation2 + $0x48] sm:$0xff]
    %v40 = vld [vmem:[#allocation2 + $0x50] sm:$0xff]
    %v41 = vld [vmem:[#allocation2 + $0x58] sm:$0xff]
    %v42 = vld [vmem:[#allocation2 + $0x60] sm:$0xff]
    %v43 = vld [vmem:[#allocation2 + $0x68] sm:$0xff]
    %v44 = vld [vmem:[#allocation2 + $0x70] sm:$0xff]
    %v45 = vld [vmem:[#allocation2 + $0x78] sm:$0xff]
    %v46 = vld [vmem:[#allocation2 + $0x80] sm:$0xff]
    %v47 = vld [vmem:[#allocation2 + $0x88] sm:$0xff]
    %v48 = vld [vmem:[#allocation2 + $0x90] sm:$0xff]
    %v49 = vld [vmem:[#allocation2 + $0x98] sm:$0xff]
    %v50 = vld [vmem:[#allocation2 + $0xa0] sm:$0xff]
    %v51 = vld [vmem:[#allocation2 + $0xa8] sm:$0xff]
    %v52 = vld [vmem:[#allocation2 + $0xb0] sm:$0xff]
    %v53 = vld [vmem:[#allocation2 + $0xb8] sm:$0xff]
    %v54 = vld [vmem:[#allocation2 + $0xc0] sm:$0xff]
    %v55 = vld [vmem:[#allocation2 + $0xc8] sm:$0xff]
    %v56 = vld [vmem:[#allocation2 + $0xd0] sm:$0xff]
    %v57 = vld [vmem:[#allocation2 + $0xd8] sm:$0xff]
    %v58 = vld [vmem:[#allocation2 + $0xe0] sm:$0xff]
    %v59 = vld [vmem:[#allocation2 + $0xe8] sm:$0xff]
    %v60 = vld [vmem:[#allocation2 + $0xf0] sm:$0xff]
    %v61 = vld [vmem:[#allocation2 + $0xf8] sm:$0xff]
    %v62 = vld [vmem:[#allocation2 + $0x100] sm:$0xff]
    %v63 = vld [vmem:[#allocation2 + $0x108] sm:$0xff]
    %v64 = vld [vmem:[#allocation2 + $0x110] sm:$0xff]
    %v65 = vld [vmem:[#allocation2 + $0x118] sm:$0xff]
    %v66 = vld [vmem:[#allocation2 + $0x120] sm:$0xff]
    %v67 = vld [vmem:[#allocation2 + $0x128] sm:$0xff]
    %v68 = vld [vmem:[#allocation2 + $0x130] sm:$0xff]
    %v69 = vld [vmem:[#allocation2 + $0x138] sm:$0xff]
    %v70 = vld [vmem:[#allocation2 + $0x140] sm:$0xff]
    %v71 = vld [vmem:[#allocation2 + $0x148] sm:$0xff]
    %v72 = vld [vmem:[#allocation2 + $0x150] sm:$0xff]
    %v73 = vld [vmem:[#allocation2 + $0x158] sm:$0xff]
    %v74 = vld [vmem:[#allocation2 + $0x160] sm:$0xff]
    %v75 = vld [vmem:[#allocation2 + $0x168] sm:$0xff]
    %v76 = vld [vmem:[#allocation2 + $0x170] sm:$0xff]
    %v77 = vld [vmem:[#allocation2 + $0x178] sm:$0xff]
    %v78 = vld [vmem:[#allocation2 + $0x180] sm:$0xff]
    %v79 = vld [vmem:[#allocation2 + $0x188] sm:$0xff]
    %v80 = vld [vmem:[#allocation2 + $0x190] sm:$0xff]
    %v81 = vld [vmem:[#allocation2 + $0x198] sm:$0xff]
    %v82 = vld [vmem:[#allocation2 + $0x1a0] sm:$0xff]
    %v83 = vld [vmem:[#allocation2 + $0x1a8] sm:$0xff]
    %v84 = vld [vmem:[#allocation2 + $0x1b0] sm:$0xff]
    %v85 = vld [vmem:[#allocation2 + $0x1b8] sm:$0xff]
    %v86 = vld [vmem:[#allocation2 + $0x1c0] sm:$0xff]
    %v87 = vld [vmem:[#allocation2 + $0x1c8] sm:$0xff]
    %v88 = vld [vmem:[#allocation2 + $0x1d0] sm:$0xff]
    %v89 = vld [vmem:[#allocation2 + $0x1d8] sm:$0xff]
    %v90 = vld [vmem:[#allocation2 + $0x1e0] sm:$0xff]
    %v91 = vld [vmem:[#allocation2 + $0x1e8] sm:$0xff]
    %v92 = vld [vmem:[#allocation2 + $0x1f0] sm:$0xff]
    %v93 = vld [vmem:[#allocation2 + $0x1f8] sm:$0xff]
    %v94 = vld [vmem:[#allocation2 + $0x200] sm:$0xff]
    %v95 = vld [vmem:[#allocation2 + $0x208] sm:$0xff]
    %v96 = vld [vmem:[#allocation2 + $0x210] sm:$0xff]
    %v97 = vld [vmem:[#allocation2 + $0x218] sm:$0xff]
    %v98 = vld [vmem:[#allocation2 + $0x220] sm:$0xff]
    %v99 = vld [vmem:[#allocation2 + $0x228] sm:$0xff]
    %v100 = vld [vmem:[#allocation2 + $0x230] sm:$0xff]
    %v101 = vld [vmem:[#allocation2 + $0x238] sm:$0xff]
    %v102 = vld [vmem:[#allocation2 + $0x240] sm:$0xff]
    %v103 = vld [vmem:[#allocation2 + $0x248] sm:$0xff]
    %v104 = vld [vmem:[#allocation2 + $0x250] sm:$0xff]
    %v105 = vld [vmem:[#allocation2 + $0x258] sm:$0xff]
    %v106 = vld [vmem:[#allocation2 + $0x260] sm:$0xff]
    %v107 = vld [vmem:[#allocation2 + $0x268] sm:$0xff]
    %v108 = vld [vmem:[#allocation2 + $0x270] sm:$0xff]
    %v109 = vld [vmem:[#allocation2 + $0x278] sm:$0xff]
    %v110 = vld [vmem:[#allocation2 + $0x280] sm:$0xff]
    %v111 = vld [vmem:[#allocation2 + $0x288] sm:$0xff]
    %v112 = vld [vmem:[#allocation2 + $0x290] sm:$0xff]
    %v113 = vld [vmem:[#allocation2 + $0x298] sm:$0xff]
    %v114 = vld [vmem:[#allocation2 + $0x2a0] sm:$0xff]
    %v115 = vld [vmem:[#allocation2 + $0x2a8] sm:$0xff]
    %v116 = vld [vmem:[#allocation2 + $0x2b0] sm:$0xff]
    %v117 = vld [vmem:[#allocation2 + $0x2b8] sm:$0xff]
    %v118 = vld [vmem:[#allocation2 + $0x2c0] sm:$0xff]
    %v119 = vld [vmem:[#allocation2 + $0x2c8] sm:$0xff]
    %v120 = vld [vmem:[#allocation2 + $0x2d0] sm:$0xff]
    %v121 = vld [vmem:[#allocation2 + $0x2d8] sm:$0xff]
    %v122 = vld [vmem:[#allocation2 + $0x2e0] sm:$0xff]
    %v123 = vld [vmem:[#allocation2 + $0x2e8] sm:$0xff]
    %v124 = vld [vmem:[#allocation2 + $0x2f0] sm:$0xff]
    %v125 = vld [vmem:[#allocation2 + $0x2f8] sm:$0xff]
    %v126 = vld [vmem:[#allocation2 + $0x300] sm:$0xff]
    %v127 = vld [vmem:[#allocation2 + $0x308] sm:$0xff]
    %v128 = vld [vmem:[#allocation2 + $0x310] sm:$0xff]
    %v129 = vld [vmem:[#allocation2 + $0x318] sm:$0xff]
    %v130 = vld [vmem:[#allocation2 + $0x320] sm:$0xff]
    %v131 = vld [vmem:[#allocation2 + $0x328] sm:$0xff]
    %v132 = vld [vmem:[#allocation2 + $0x330] sm:$0xff]
    %v133 = vld [vmem:[#allocation2 + $0x338] sm:$0xff]
    %v134 = vld [vmem:[#allocation2 + $0x340] sm:$0xff]
    %v135 = vld [vmem:[#allocation2 + $0x348] sm:$0xff]
    %v136 = vld [vmem:[#allocation2 + $0x350] sm:$0xff]
    %v137 = vld [vmem:[#allocation2 + $0x358] sm:$0xff]
    %v138 = vld [vmem:[#allocation2 + $0x360] sm:$0xff]
    %v139 = vld [vmem:[#allocation2 + $0x368] sm:$0xff]
    %v140 = vld [vmem:[#allocation2 + $0x370] sm:$0xff]
    %v141 = vld [vmem:[#allocation2 + $0x378] sm:$0xff]
    %v142 = vld [vmem:[#allocation2 + $0x380] sm:$0xff]
    %v143 = vld [vmem:[#allocation2 + $0x388] sm:$0xff]
    %v144 = vld [vmem:[#allocation2 + $0x390] sm:$0xff]
    %v145 = vld [vmem:[#allocation2 + $0x398] sm:$0xff]
    %v146 = vld [vmem:[#allocation2 + $0x3a0] sm:$0xff]
    %v147 = vld [vmem:[#allocation2 + $0x3a8] sm:$0xff]
    %v148 = vld [vmem:[#allocation2 + $0x3b0] sm:$0xff]
    %v149 = vld [vmem:[#allocation2 + $0x3b8] sm:$0xff]
    %v150 = vld [vmem:[#allocation2 + $0x3c0] sm:$0xff]
    %v151 = vld [vmem:[#allocation2 + $0x3c8] sm:$0xff]
    %v152 = vld [vmem:[#allocation2 + $0x3d0] sm:$0xff]
    %v153 = vld [vmem:[#allocation2 + $0x3d8] sm:$0xff]
    %v154 = vld [vmem:[#allocation2 + $0x3e0] sm:$0xff]
    %v155 = vld [vmem:[#allocation2 + $0x3e8] sm:$0xff]
    %v156 = vld [vmem:[#allocation2 + $0x3f0] sm:$0xff]
    %v157 = vld [vmem:[#allocation2 + $0x3f8] sm:$0xff]
    %v158 = vld [vmem:[#allocation2 + $0x400] sm:$0xff]
    %v159 = vld [vmem:[#allocation2 + $0x408] sm:$0xff]
    %v160 = vld [vmem:[#allocation2 + $0x410] sm:$0xff]
    %v161 = vld [vmem:[#allocation2 + $0x418] sm:$0xff]
    %v162 = vld [vmem:[#allocation2 + $0x420] sm:$0xff]
    %v163 = vld [vmem:[#allocation2 + $0x428] sm:$0xff]
    %v164 = vld [vmem:[#allocation2 + $0x430] sm:$0xff]
    %v165 = vld [vmem:[#allocation2 + $0x438] sm:$0xff]
    %v166 = vld [vmem:[#allocation2 + $0x440] sm:$0xff]
    %v167 = vld [vmem:[#allocation2 + $0x448] sm:$0xff]
    %v168 = vld [vmem:[#allocation2 + $0x450] sm:$0xff]
    %v169 = vld [vmem:[#allocation2 + $0x458] sm:$0xff]
    %v170 = vld [vmem:[#allocation2 + $0x460] sm:$0xff]
    %v171 = vld [vmem:[#allocation2 + $0x468] sm:$0xff]
    %v172 = vld [vmem:[#allocation2 + $0x470] sm:$0xff]
    %v173 = vld [vmem:[#allocation2 + $0x478] sm:$0xff]
    %v174 = vld [vmem:[#allocation2 + $0x480] sm:$0xff]
    %v175 = vld [vmem:[#allocation2 + $0x488] sm:$0xff]
    %v176 = vld [vmem:[#allocation2 + $0x490] sm:$0xff]
    %v177 = vld [vmem:[#allocation2 + $0x498] sm:$0xff]
    %v178 = vld [vmem:[#allocation2 + $0x4a0] sm:$0xff]
    %v179 = vld [vmem:[#allocation2 + $0x4a8] sm:$0xff]
    %v180 = vld [vmem:[#allocation2 + $0x4b0] sm:$0xff]
    %v181 = vld [vmem:[#allocation2 + $0x4b8] sm:$0xff]
    %v182 = vld [vmem:[#allocation2 + $0x4c0] sm:$0xff]
    %v183 = vld [vmem:[#allocation2 + $0x4c8] sm:$0xff]
    %v184 = vld [vmem:[#allocation2 + $0x4d0] sm:$0xff]
    %v185 = vld [vmem:[#allocation2 + $0x4d8] sm:$0xff]
    %v186 = vld [vmem:[#allocation2 + $0x4e0] sm:$0xff]
    %v187 = vld [vmem:[#allocation2 + $0x4e8] sm:$0xff]
    %v188 = vld [vmem:[#allocation2 + $0x4f0] sm:$0xff]
    %v189 = vld [vmem:[#allocation2 + $0x4f8] sm:$0xff]
    %v190 = vld [vmem:[#allocation2 + $0x500] sm:$0xff]
    %v191 = vld [vmem:[#allocation2 + $0x508] sm:$0xff]
    %v192 = vld [vmem:[#allocation2 + $0x510] sm:$0xff]
    %v193 = vld [vmem:[#allocation2 + $0x518] sm:$0xff]
    %v194 = vld [vmem:[#allocation2 + $0x520] sm:$0xff]
    %v195 = vld [vmem:[#allocation2 + $0x528] sm:$0xff]
    %v196 = vld [vmem:[#allocation2 + $0x530] sm:$0xff]
    %v197 = vld [vmem:[#allocation2 + $0x538] sm:$0xff]
    %v198 = vld [vmem:[#allocation2 + $0x540] sm:$0xff]
    %v199 = vld [vmem:[#allocation2 + $0x548] sm:$0xff]
    %v200 = vld [vmem:[#allocation2 + $0x550] sm:$0xff]
    %v201 = vld [vmem:[#allocation2 + $0x558] sm:$0xff]
    %v202 = vld [vmem:[#allocation2 + $0x560] sm:$0xff]
    %v203 = vld [vmem:[#allocation2 + $0x568] sm:$0xff]
    %v204 = vld [vmem:[#allocation2 + $0x570] sm:$0xff]
    %v205 = vld [vmem:[#allocation2 + $0x578] sm:$0xff]
    %v206 = vld [vmem:[#allocation2 + $0x580] sm:$0xff]
    %v207 = vld [vmem:[#allocation2 + $0x588] sm:$0xff]
    %v208 = vld [vmem:[#allocation2 + $0x590] sm:$0xff]
    %v209 = vld [vmem:[#allocation2 + $0x598] sm:$0xff]
    %v210 = vld [vmem:[#allocation2 + $0x5a0] sm:$0xff]
    %v211 = vld [vmem:[#allocation2 + $0x5a8] sm:$0xff]
    %v212 = vld [vmem:[#allocation2 + $0x5b0] sm:$0xff]
    %v213 = vld [vmem:[#allocation2 + $0x5b8] sm:$0xff]
    %v214 = vld [vmem:[#allocation2 + $0x5c0] sm:$0xff]
    %v215 = vld [vmem:[#allocation2 + $0x5c8] sm:$0xff]
    %v216 = vld [vmem:[#allocation2 + $0x5d0] sm:$0xff]
    %v217 = vld [vmem:[#allocation2 + $0x5d8] sm:$0xff]
    %v218 = vld [vmem:[#allocation2 + $0x5e0] sm:$0xff]
    %v219 = vld [vmem:[#allocation2 + $0x5e8] sm:$0xff]
    %v220 = vld [vmem:[#allocation2 + $0x5f0] sm:$0xff]
    %v221 = vld [vmem:[#allocation2 + $0x5f8] sm:$0xff]
    %222 = vmatpush.msra.mxu0 %v90
    %223 = vmatpush.msra.mxu0 %v86
    %224 = vmatpush.msra.mxu0 %v82
    %225 = vmatpush.msra.mxu0 %v78
    %226 = vmatpush.msra.mxu0 %v74
    %227 = vmatpush.msra.mxu0 %v70
    %228 = vmatpush.msra.mxu0 %v66
    %229 = vmatpush.msra.mxu0 %v62
    %230 = vmatpush.msra.mxu0 %v58
    %231 = vmatpush.msra.mxu0 %v54
    %232 = vmatpush.msra.mxu0 %v50
    %233 = vmatpush.msra.mxu0 %v46
    %234 = vmatpush.msra.mxu0 %v42
    %235 = vmatpush.msra.mxu0 %v38
    %236 = vmatpush.msra.mxu0 %v34
    %237 = vmatpush.msra.mxu0 %v30
    %238 = vmatmul.f32.gmra.mxu0 %v27
    %v239 = vpop.f32.mrf.mxu0
    %v240 = vadd.f32 0.0, %v239
    %241 = vdwg.mxu0
    %242 = vmatpush.msra.mxu0 %v154
    %243 = vmatpush.msra.mxu0 %v150
    %244 = vmatpush.msra.mxu0 %v146
    %245 = vmatpush.msra.mxu0 %v142
    %246 = vmatpush.msra.mxu0 %v138
    %247 = vmatpush.msra.mxu0 %v134
    %248 = vmatpush.msra.mxu0 %v130
    %249 = vmatpush.msra.mxu0 %v126
    %250 = vmatpush.msra.mxu0 %v122
    %251 = vmatpush.msra.mxu0 %v118
    %252 = vmatpush.msra.mxu0 %v114
    %253 = vmatpush.msra.mxu0 %v110
    %254 = vmatpush.msra.mxu0 %v106
    %255 = vmatpush.msra.mxu0 %v102
    %256 = vmatpush.msra.mxu0 %v98
    %257 = vmatpush.msra.mxu0 %v94
    %258 = vmatmul.f32.gmra.mxu0 %v28
    %v259 = vpop.f32.mrf.mxu0
    %v260 = vadd.f32 %v240, %v259
    %261 = vdwg.mxu0
    %262 = vmatpush.msra.mxu0 %v218
    %263 = vmatpush.msra.mxu0 %v214
    %264 = vmatpush.msra.mxu0 %v210
    %265 = vmatpush.msra.mxu0 %v206
    %266 = vmatpush.msra.mxu0 %v202
    %267 = vmatpush.msra.mxu0 %v198
    %268 = vmatpush.msra.mxu0 %v194
    %269 = vmatpush.msra.mxu0 %v190
    %270 = vmatpush.msra.mxu0 %v186
    %271 = vmatpush.msra.mxu0 %v182
    %272 = vmatpush.msra.mxu0 %v178
    %273 = vmatpush.msra.mxu0 %v174
    %274 = vmatpush.msra.mxu0 %v170
    %275 = vmatpush.msra.mxu0 %v166
    %276 = vmatpush.msra.mxu0 %v162
    %277 = vmatpush.msra.mxu0 %v158
    %278 = vmatmul.f32.gmra.mxu0 %v29
    %v279 = vpop.f32.mrf.mxu0
    %v280 = vadd.f32 %v260, %v279
    %281 = vdwg.mxu0
    %282 = vmatpush.msra.mxu0 %v91
    %283 = vmatpush.msra.mxu0 %v87
    %284 = vmatpush.msra.mxu0 %v83
    %285 = vmatpush.msra.mxu0 %v79
    %286 = vmatpush.msra.mxu0 %v75
    %287 = vmatpush.msra.mxu0 %v71
    %288 = vmatpush.msra.mxu0 %v67
    %289 = vmatpush.msra.mxu0 %v63
    %290 = vmatpush.msra.mxu0 %v59
    %291 = vmatpush.msra.mxu0 %v55
    %292 = vmatpush.msra.mxu0 %v51
    %293 = vmatpush.msra.mxu0 %v47
    %294 = vmatpush.msra.mxu0 %v43
    %295 = vmatpush.msra.mxu0 %v39
    %296 = vmatpush.msra.mxu0 %v35
    %297 = vmatpush.msra.mxu0 %v31
    %298 = vmatmul.f32.gmra.mxu0 %v27
    %v299 = vpop.f32.mrf.mxu0
    %v300 = vadd.f32 0.0, %v299
    %301 = vdwg.mxu0
    %302 = vmatpush.msra.mxu0 %v155
    %303 = vmatpush.msra.mxu0 %v151
    %304 = vmatpush.msra.mxu0 %v147
    %305 = vmatpush.msra.mxu0 %v143
    %306 = vmatpush.msra.mxu0 %v139
    %307 = vmatpush.msra.mxu0 %v135
    %308 = vmatpush.msra.mxu0 %v131
    %309 = vmatpush.msra.mxu0 %v127
    %310 = vmatpush.msra.mxu0 %v123
    %311 = vmatpush.msra.mxu0 %v119
    %312 = vmatpush.msra.mxu0 %v115
    %313 = vmatpush.msra.mxu0 %v111
    %314 = vmatpush.msra.mxu0 %v107
    %315 = vmatpush.msra.mxu0 %v103
    %316 = vmatpush.msra.mxu0 %v99
    %317 = vmatpush.msra.mxu0 %v95
    %318 = vmatmul.f32.gmra.mxu0 %v28
    %v319 = vpop.f32.mrf.mxu0
    %v320 = vadd.f32 %v300, %v319
    %321 = vdwg.mxu0
    %322 = vmatpush.msra.mxu0 %v219
    %323 = vmatpush.msra.mxu0 %v215
    %324 = vmatpush.msra.mxu0 %v211
    %325 = vmatpush.msra.mxu0 %v207
    %326 = vmatpush.msra.mxu0 %v203
    %327 = vmatpush.msra.mxu0 %v199
    %328 = vmatpush.msra.mxu0 %v195
    %329 = vmatpush.msra.mxu0 %v191
    %330 = vmatpush.msra.mxu0 %v187
    %331 = vmatpush.msra.mxu0 %v183
    %332 = vmatpush.msra.mxu0 %v179
    %333 = vmatpush.msra.mxu0 %v175
    %334 = vmatpush.msra.mxu0 %v171
    %335 = vmatpush.msra.mxu0 %v167
    %336 = vmatpush.msra.mxu0 %v163
    %337 = vmatpush.msra.mxu0 %v159
    %338 = vmatmul.f32.gmra.mxu0 %v29
    %v339 = vpop.f32.mrf.mxu0
    %v340 = vadd.f32 %v320, %v339
    %341 = vdwg.mxu0
    %342 = vmatpush.msra.mxu0 %v92
    %343 = vmatpush.msra.mxu0 %v88
    %344 = vmatpush.msra.mxu0 %v84
    %345 = vmatpush.msra.mxu0 %v80
    %346 = vmatpush.msra.mxu0 %v76
    %347 = vmatpush.msra.mxu0 %v72
    %348 = vmatpush.msra.mxu0 %v68
    %349 = vmatpush.msra.mxu0 %v64
    %350 = vmatpush.msra.mxu0 %v60
    %351 = vmatpush.msra.mxu0 %v56
    %352 = vmatpush.msra.mxu0 %v52
    %353 = vmatpush.msra.mxu0 %v48
    %354 = vmatpush.msra.mxu0 %v44
    %355 = vmatpush.msra.mxu0 %v40
    %356 = vmatpush.msra.mxu0 %v36
    %357 = vmatpush.msra.mxu0 %v32
    %358 = vmatmul.f32.gmra.mxu0 %v27
    %v359 = vpop.f32.mrf.mxu0
    %v360 = vadd.f32 0.0, %v359
    %361 = vdwg.mxu0
    %362 = vmatpush.msra.mxu0 %v156
    %363 = vmatpush.msra.mxu0 %v152
    %364 = vmatpush.msra.mxu0 %v148
    %365 = vmatpush.msra.mxu0 %v144
    %366 = vmatpush.msra.mxu0 %v140
    %367 = vmatpush.msra.mxu0 %v136
    %368 = vmatpush.msra.mxu0 %v132
    %369 = vmatpush.msra.mxu0 %v128
    %370 = vmatpush.msra.mxu0 %v124
    %371 = vmatpush.msra.mxu0 %v120
    %372 = vmatpush.msra.mxu0 %v116
    %373 = vmatpush.msra.mxu0 %v112
    %374 = vmatpush.msra.mxu0 %v108
    %375 = vmatpush.msra.mxu0 %v104
    %376 = vmatpush.msra.mxu0 %v100
    %377 = vmatpush.msra.mxu0 %v96
    %378 = vmatmul.f32.gmra.mxu0 %v28
    %v379 = vpop.f32.mrf.mxu0
    %v380 = vadd.f32 %v360, %v379
    %381 = vdwg.mxu0
    %382 = vmatpush.msra.mxu0 %v220
    %383 = vmatpush.msra.mxu0 %v216
    %384 = vmatpush.msra.mxu0 %v212
    %385 = vmatpush.msra.mxu0 %v208
    %386 = vmatpush.msra.mxu0 %v204
    %387 = vmatpush.msra.mxu0 %v200
    %388 = vmatpush.msra.mxu0 %v196
    %389 = vmatpush.msra.mxu0 %v192
    %390 = vmatpush.msra.mxu0 %v188
    %391 = vmatpush.msra.mxu0 %v184
    %392 = vmatpush.msra.mxu0 %v180
    %393 = vmatpush.msra.mxu0 %v176
    %394 = vmatpush.msra.mxu0 %v172
    %395 = vmatpush.msra.mxu0 %v168
    %396 = vmatpush.msra.mxu0 %v164
    %397 = vmatpush.msra.mxu0 %v160
    %398 = vmatmul.f32.gmra.mxu0 %v29
    %v399 = vpop.f32.mrf.mxu0
    %v400 = vadd.f32 %v380, %v399
    %401 = vdwg.mxu0
    %402 = vmatpush.msra.mxu0 %v93
    %403 = vmatpush.msra.mxu0 %v89
    %404 = vmatpush.msra.mxu0 %v85
    %405 = vmatpush.msra.mxu0 %v81
    %406 = vmatpush.msra.mxu0 %v77
    %407 = vmatpush.msra.mxu0 %v73
    %408 = vmatpush.msra.mxu0 %v69
    %409 = vmatpush.msra.mxu0 %v65
    %410 = vmatpush.msra.mxu0 %v61
    %411 = vmatpush.msra.mxu0 %v57
    %412 = vmatpush.msra.mxu0 %v53
    %413 = vmatpush.msra.mxu0 %v49
    %414 = vmatpush.msra.mxu0 %v45
    %415 = vmatpush.msra.mxu0 %v41
    %416 = vmatpush.msra.mxu0 %v37
    %417 = vmatpush.msra.mxu0 %v33
    %418 = vmatmul.f32.gmra.mxu0 %v27
    %v419 = vpop.f32.mrf.mxu0
    %v420 = vadd.f32 0.0, %v419
    %421 = vdwg.mxu0
    %422 = vmatpush.msra.mxu0 %v157
    %423 = vmatpush.msra.mxu0 %v153
    %424 = vmatpush.msra.mxu0 %v149
    %425 = vmatpush.msra.mxu0 %v145
    %426 = vmatpush.msra.mxu0 %v141
    %427 = vmatpush.msra.mxu0 %v137
    %428 = vmatpush.msra.mxu0 %v133
    %429 = vmatpush.msra.mxu0 %v129
    %430 = vmatpush.msra.mxu0 %v125
    %431 = vmatpush.msra.mxu0 %v121
    %432 = vmatpush.msra.mxu0 %v117
    %433 = vmatpush.msra.mxu0 %v113
    %434 = vmatpush.msra.mxu0 %v109
    %435 = vmatpush.msra.mxu0 %v105
    %436 = vmatpush.msra.mxu0 %v101
    %437 = vmatpush.msra.mxu0 %v97
    %438 = vmatmul.f32.gmra.mxu0 %v28
    %v439 = vpop.f32.mrf.mxu0
    %v440 = vadd.f32 %v420, %v439
    %441 = vdwg.mxu0
    %442 = vmatpush.msra.mxu0 %v221
    %443 = vmatpush.msra.mxu0 %v217
    %444 = vmatpush.msra.mxu0 %v213
    %445 = vmatpush.msra.mxu0 %v209
    %446 = vmatpush.msra.mxu0 %v205
    %447 = vmatpush.msra.mxu0 %v201
    %448 = vmatpush.msra.mxu0 %v197
    %449 = vmatpush.msra.mxu0 %v193
    %450 = vmatpush.msra.mxu0 %v189
    %451 = vmatpush.msra.mxu0 %v185
    %452 = vmatpush.msra.mxu0 %v181
    %453 = vmatpush.msra.mxu0 %v177
    %454 = vmatpush.msra.mxu0 %v173
    %455 = vmatpush.msra.mxu0 %v169
    %456 = vmatpush.msra.mxu0 %v165
    %457 = vmatpush.msra.mxu0 %v161
    %458 = vmatmul.f32.gmra.mxu0 %v29
    %v459 = vpop.f32.mrf.mxu0
    %v460 = vadd.f32 %v440, %v459
    %461 = vdwg.mxu0
    %462 = vst [vmem:[%s2] sm:$0xff] %v280
    %463 = vst [vmem:[%s2 + $0x8] sm:$0xff] %v340
    %464 = vst [vmem:[%s2 + $0x10] sm:$0xff] %v400
    %465 = vst [vmem:[%s2 + $0x18] sm:$0xff] %v460
    // Predicated region
    $region14: #{_triplane_blocks.1} parent=1 // pred_check
      _
    $region15: #{_triplane_blocks.1} parent=1 // pred_check_branch
      %467 = sbr.rel (0) target = $region17
    $region16: #{_triplane_blocks.1} parent=1 // pred_region
      _
    $region17: #{_triplane_blocks.1} parent=1 // pred_fallthru
      _
    // Predicated region
    $region18: #{_triplane_blocks.1} parent=1 // pred_check
      _
    $region19: #{_triplane_blocks.1} parent=1 // pred_check_branch
      %469 = sbr.rel (0) target = $region21
    $region20: #{_triplane_blocks.1} parent=1 // pred_region
      _
    $region21: #{_triplane_blocks.1} parent=1 // pred_fallthru
      _
    %470 = vsyncpa [#allocation3], 1

</llo_original>
